<compile_context>
chip_gen: v7x
topology: tpu7x:2x2x1
jax: 0.10.0
libtpu: 0.0.40
codegen_flags: <defaults>
</compile_context>

<pallas_src>
import math

import jax
import jax.numpy as jnp
from jax.experimental import pallas as pl
from jax.experimental.pallas import tpu as pltpu


# -----------------------------------------------------------------------------
# Pallas kernel: projection  out = emb - (<normalize(w_t)[temp], emb>) * normalize(w_t)[temp]
# -----------------------------------------------------------------------------
def _project_kernel(temp_ref, wt_ref, emb_ref, out_ref):
    # temp_ref: (TILE_N, 1) int32 row indices into w_t
    # wt_ref  : (T, E)      full (un-normalized) w_t, resident across grid steps
    # emb_ref : (TILE_N, E)
    # out_ref : (TILE_N, E)
    wt = wt_ref[...].astype(jnp.float32)     # (T, E)
    emb = emb_ref[...].astype(jnp.float32)   # (tn, E)
    idx = temp_ref[...]                      # (tn, 1) int32

    # F.normalize(p=2, dim=-1): x / max(||x||, 1e-12)  ==  x * rsqrt(max(||x||^2, 1e-24))
    # Done on the T (= temp_size) rows only; rsqrt goes to the EUP slot.
    sumsq = jnp.sum(wt * wt, axis=-1, keepdims=True)          # (T, 1)
    wt_n = wt * jax.lax.rsqrt(jnp.maximum(sumsq, 1e-24))      # (T, E)

    # In-kernel row gather via one-hot matmul (TPU-safe gather, uses the idle MXU).
    tn, t = idx.shape[0], wt.shape[0]
    onehot = (idx == jax.lax.broadcasted_iota(jnp.int32, (tn, t), 1)).astype(jnp.float32)
    w = jnp.dot(onehot, wt_n, preferred_element_type=jnp.float32)   # (tn, E) gathered rows

    proj_len = jnp.sum(w * emb, axis=-1, keepdims=True)       # (tn, 1)
    out_ref[...] = (emb - proj_len * w).astype(out_ref.dtype)


# -----------------------------------------------------------------------------
# Wrappers
# -----------------------------------------------------------------------------
def kg_forward(params):
    """Equivalent of KG.forward(): returns the parameter tensors (pass-through,
    no kernel — copying parameters through VMEM would only waste HBM bandwidth)."""
    return (
        params["head_emb"],
        params["relation_emb"],
        params["tail_emb"],
        params["r_mat"],
    )


def kg_project(params, emb, temp, *, tile_n=512):
    """Equivalent of KG.project(emb, temp), as a row-tiled Pallas kernel."""
    n, e = emb.shape
    w_t = params["w_t"]
    t = w_t.shape[0]

    tile_n = min(tile_n, n)  # NOTE: sweep per chip (v7x has 64 MiB VMEM vs 128 MiB on v5e/v6e)
    temp_2d = temp.astype(jnp.int32).reshape(n, 1)

    return pl.pallas_call(
        _project_kernel,
        out_shape=jax.ShapeDtypeStruct((n, e), emb.dtype),
        grid=(pl.cdiv(n, tile_n),),
        in_specs=[
            pl.BlockSpec((tile_n, 1), lambda i: (i, 0)),  # temp indices (tiny traffic)
            pl.BlockSpec((t, e), lambda i: (0, 0)),       # whole w_t, resident in VMEM
            pl.BlockSpec((tile_n, e), lambda i: (i, 0)),  # emb rows
        ],
        out_specs=pl.BlockSpec((tile_n, e), lambda i: (i, 0)),
        compiler_params=pltpu.CompilerParams(
            dimension_semantics=("parallel",),            # rows are independent -> megacore on v7x
            vmem_limit_bytes=48 * 1024 * 1024,
        ),
    )(temp_2d, w_t, emb)


# -----------------------------------------------------------------------------
# Deterministic parameter init (mirrors KG._init_embeddings shapes/inits)
# -----------------------------------------------------------------------------
def init_kg_params(key, item_num, beh_num, entity_num, temp_size, emb_size):
    k1, k2, k3, k4, k5 = jax.random.split(key, 5)
    head = 0.1 * jax.random.normal(k1, (item_num, emb_size), jnp.float32)
    rel = 0.1 * jax.random.normal(k2, (beh_num, emb_size), jnp.float32)
    tail = 0.1 * jax.random.normal(k3, (entity_num, emb_size), jnp.float32)
    # xavier_uniform with gain = calculate_gain('relu') = sqrt(2)
    gain = math.sqrt(2.0)
    bound_r = gain * math.sqrt(6.0 / (emb_size + emb_size))
    r_mat = jax.random.uniform(
        k4, (beh_num, emb_size, emb_size), jnp.float32, -bound_r, bound_r
    )
    bound_w = gain * math.sqrt(6.0 / (temp_size + emb_size))
    w_t = jax.random.uniform(
        k5, (temp_size, emb_size), jnp.float32, -bound_w, bound_w
    )
    return {
        "head_emb": head,
        "relation_emb": rel,
        "tail_emb": tail,
        "r_mat": r_mat,
        "w_t": w_t,
    }


# -----------------------------------------------------------------------------
# Main
# -----------------------------------------------------------------------------
if __name__ == "__main__":
    item_num = 16
    beh_num = 3
    entity_num = 32
    temp_size = 4
    emb_size = 32

    key = jax.random.PRNGKey(0)
    kp, ke, kt = jax.random.split(key, 3)
    params = init_kg_params(kp, item_num, beh_num, entity_num, temp_size, emb_size)

    # forward() — parameter pass-through (no kernel needed)
    head_w, rel_w, tail_w, r_mat = kg_forward(params)
    jax.block_until_ready((head_w, rel_w, tail_w, r_mat))

    # project() — the actual compute path, as a tiled Pallas kernel
    n = 256
    emb = 0.1 * jax.random.normal(ke, (n, emb_size), jnp.float32)
    temp = jax.random.randint(kt, (n,), 0, temp_size)
    proj = kg_project(params, emb, temp, tile_n=128)  # grid of 2 steps at toy size
    jax.block_until_ready(proj)

    # reference check (pure JAX, F.normalize semantics) for the project kernel
    w_n = params["w_t"] / jnp.maximum(
        jnp.linalg.norm(params["w_t"], axis=-1, keepdims=True), 1e-12
    )
    wt = w_n[temp]
    ref = emb - jnp.sum(wt * emb, axis=1, keepdims=True) * wt
    assert jnp.allclose(proj, ref, atol=1e-5), "project kernel mismatch"
    assert jnp.array_equal(head_w, params["head_emb"])
    assert jnp.array_equal(r_mat, params["r_mat"])

    print("KERNEL_OK")
</pallas_src>

<mosaic_0001>
module attributes {stable_mosaic.version = 11 : i64} {
  func.func @_project_kernel(%arg0: i32, %arg1: memref<128x1xi32, #tpu.memory_space<vmem>>, %arg2: memref<4x32xf32, #tpu.memory_space<vmem>>, %arg3: memref<128x32xf32, #tpu.memory_space<vmem>>, %arg4: memref<128x32xf32, #tpu.memory_space<vmem>>) attributes {dimension_semantics = [#tpu.dimension_semantics<parallel>], iteration_bounds = array<i64: 2>, scalar_prefetch = 0 : i64, scratch_operands = 0 : i64, tpu.core_type = #tpu.core_type<tc>, window_params = [{transform_indices = @transform_0, window_bounds = array<i64: 128, 1>}, {pipeline_mode = #tpu.pipeline_mode<synchronous>, transform_indices = @transform_1, window_bounds = array<i64: 4, 32>}, {transform_indices = @transform_2, window_bounds = array<i64: 128, 32>}, {transform_indices = @transform_3, window_bounds = array<i64: 128, 32>}]} {
    %c0 = arith.constant 0 : index
    %c0_0 = arith.constant 0 : index
    %0 = vector.load %arg2[%c0, %c0_0] : memref<4x32xf32, #tpu.memory_space<vmem>>, vector<4x32xf32>
    %c0_1 = arith.constant 0 : index
    %c0_2 = arith.constant 0 : index
    %1 = vector.load %arg3[%c0_1, %c0_2] : memref<128x32xf32, #tpu.memory_space<vmem>>, vector<128x32xf32>
    %c0_3 = arith.constant 0 : index
    %c0_4 = arith.constant 0 : index
    %2 = vector.load %arg1[%c0_3, %c0_4] : memref<128x1xi32, #tpu.memory_space<vmem>>, vector<128x1xi32>
    %3 = arith.mulf %0, %0 : vector<4x32xf32>
    %cst = arith.constant dense<0.000000e+00> : vector<4xf32>
    %4 = vector.multi_reduction <add>, %3, %cst [1] : vector<4x32xf32> to vector<4xf32>
    %5 = vector.shape_cast %4 : vector<4xf32> to vector<4x1xf32>
    %cst_5 = arith.constant 1.000000e-24 : f32
    %6 = vector.broadcast %cst_5 : f32 to vector<4x1xf32>
    %7 = arith.maximumf %5, %6 : vector<4x1xf32>
    %8 = math.rsqrt %7 : vector<4x1xf32>
    %9 = vector.broadcast %8 : vector<4x1xf32> to vector<4x32xf32>
    %10 = arith.mulf %0, %9 : vector<4x32xf32>
    %11 = tpu.iota {dimensions = array<i32: 1>} : vector<128x4xi32>
    %12 = vector.broadcast %2 : vector<128x1xi32> to vector<128x4xi32>
    %13 = arith.cmpi eq, %12, %11 : vector<128x4xi32>
    %14 = arith.extui %13 : vector<128x4xi1> to vector<128x4xi32>
    %15 = arith.sitofp %14 : vector<128x4xi32> to vector<128x4xf32>
    %cst_6 = arith.constant dense<0.000000e+00> : vector<128x32xf32>
    %16 = tpu.matmul %15, %10, %cst_6 {dimension_numbers = #tpu.dot_dimension_numbers<[1], [0], [0], [1], [0, 0, 1, 1], [], []>} : vector<128x4xf32>, vector<4x32xf32>, vector<128x32xf32> -> vector<128x32xf32>
    %17 = arith.mulf %16, %1 : vector<128x32xf32>
    %cst_7 = arith.constant dense<0.000000e+00> : vector<128xf32>
    %18 = vector.multi_reduction <add>, %17, %cst_7 [1] : vector<128x32xf32> to vector<128xf32>
    %19 = vector.shape_cast %18 : vector<128xf32> to vector<128x1xf32>
    %20 = vector.broadcast %19 : vector<128x1xf32> to vector<128x32xf32>
    %21 = arith.mulf %20, %16 : vector<128x32xf32>
    %22 = arith.subf %1, %21 : vector<128x32xf32>
    %c0_8 = arith.constant 0 : index
    %c0_9 = arith.constant 0 : index
    %23 = vector.load %arg4[%c0_8, %c0_9] : memref<128x32xf32, #tpu.memory_space<vmem>>, vector<128x32xf32>
    tpu.vector_store %arg4[%c0_8, %c0_9], %22 {strides = array<i32>} : memref<128x32xf32, #tpu.memory_space<vmem>>, vector<128x32xf32>,
    return
  }
  func.func @transform_0(%arg0: i32) -> (i32, i32) {
    %c0_i32 = arith.constant 0 : i32
    %c0_i32_0 = arith.constant 0 : i32
    return %arg0, %c0_i32 : i32, i32
  }
  func.func @transform_1(%arg0: i32) -> (i32, i32) {
    %c0_i32 = arith.constant 0 : i32
    %c0_i32_0 = arith.constant 0 : i32
    %c0_i32_1 = arith.constant 0 : i32
    return %c0_i32, %c0_i32_0 : i32, i32
  }
  func.func @transform_2(%arg0: i32) -> (i32, i32) {
    %c0_i32 = arith.constant 0 : i32
    %c0_i32_0 = arith.constant 0 : i32
    return %arg0, %c0_i32 : i32, i32
  }
  func.func @transform_3(%arg0: i32) -> (i32, i32) {
    %c0_i32 = arith.constant 0 : i32
    %c0_i32_0 = arith.constant 0 : i32
    return %arg0, %c0_i32 : i32, i32
  }
}

</mosaic_0001>

<llo_original>
// kernel: tpu_custom_call.1
$region0: #{tpu_custom_call.1}
  #allocation0 [shape = 'u32[]', space=smem, size = 0x4, offset = 0x4, fixed_abs, tag = 'smem constant byte address 0x4 - core index']
  #allocation1 [shape = 'u32[144,128]{1,0:T(1,128)}', space=vmem, size = 0x12000, scoped, tag = 'internal scratch']
  %s0 = inlined_call_operand.vmem [shape: s32[256,1], index: 0, kind: input, shape index: {}]
  %s1 = inlined_call_operand.vmem [shape: f32[4,32], index: 1, kind: input, shape index: {}]
  %s2 = inlined_call_operand.vmem [shape: f32[256,32], index: 2, kind: input, shape index: {}]
  %s3 = inlined_call_operand.vmem [shape: f32[256,32], index: 3, kind: output, shape index: {}]
  %s4 = sld [smem:[#allocation0]]
  $region45: #{tpu_custom_call.1} parent=0
    _
  %s6 = ssub.s32 1, %s4
  %s7 = scalar_select 0, %s6, %s4
  loop: start=0, step=1, limit=4
  $region2: #{tpu_custom_call.1} parent=0 // loop_pre_header
    _
  $region3: #{tpu_custom_call.1} parent=0 // loop_header
    %s9 = sphi 0, %s13
    %p10 = scmp.ge.s32.totalorder %s9, 4
    %s19 = sphi 0, %s21
    %s22 = sphi 0, %s19
    %s23 = sphi 0, %s22
    %s39 = sphi 0, %s23
    %s43 = sphi 0, %s43
    %s45 = sphi 0, %s43
    %s46 = sphi 0, %s45
    %s60 = sphi 0, %s46
    %s66 = sphi 0, %s68
    %s69 = sphi 0, %s66
    %s70 = sphi 0, %s69
    %s86 = sphi 0, %s70
    %s92 = sphi 0, %s94
    %s95 = sphi 0, %s92
    %s96 = sphi 0, %s95
    %s112 = sphi 0, %s96
  $region4: #{tpu_custom_call.1} parent=0 // loop_header_branch
    %12 = sbr.rel (%p10) target = $region8
  $region5: #{tpu_custom_call.1} parent=0 // loop_body
    %s14 = ssub.s32 %s9, 1
    %s15 = ssub.s32 %s9, 2
    %s16 = sadd.s32 %s9, 1
    %s17 = ssub.s32 %s9, %s16
    %p18 = scmp.eq.s32.totalorder %s17, 0
    %s20 = sadd.s32 %s19, 1
    %s21 = scalar_select %p18, %s19, %s20
    %p24 = pneg %p18
    %p25 = scmp.eq.s32.totalorder %s9, 1
    %p26 = por %p24, %p25
    %p27 = scmp.ne.s32.totalorder %s19, %s22
    %p28 = scmp.eq.s32.totalorder %s9, 0
    %p29 = por %p27, %p28
    %p30 = scmp.ne.s32.totalorder %s19, %s22
    %p31 = scmp.eq.s32.totalorder %s14, 1
    %p32 = por %p30, %p31
    %p33 = scmp.ne.s32.totalorder %s22, %s23
    %p34 = scmp.eq.s32.totalorder %s14, 0
    %p35 = por %p33, %p34
    %p36 = scmp.ne.s32.totalorder %s22, %s23
    %p37 = scmp.eq.s32.totalorder %s15, 1
    %p38 = por %p36, %p37
    %p40 = scmp.ne.s32.totalorder %s23, %s39
    %p41 = scmp.eq.s32.totalorder %s15, 0
    %p42 = por %p40, %p41
    %s44 = sadd.s32 %s43, 1
    %p47 = scmp.eq.s32.totalorder %s9, 1
    %p48 = scmp.ne.s32.totalorder %s43, %s45
    %p49 = scmp.eq.s32.totalorder %s9, 0
    %p50 = por %p48, %p49
    %p51 = scmp.ne.s32.totalorder %s43, %s45
    %p52 = scmp.eq.s32.totalorder %s14, 1
    %p53 = por %p51, %p52
    %p54 = scmp.ne.s32.totalorder %s45, %s46
    %p55 = scmp.eq.s32.totalorder %s14, 0
    %p56 = por %p54, %p55
    %p57 = scmp.ne.s32.totalorder %s45, %s46
    %p58 = scmp.eq.s32.totalorder %s15, 1
    %p59 = por %p57, %p58
    %p61 = scmp.ne.s32.totalorder %s46, %s60
    %p62 = scmp.eq.s32.totalorder %s15, 0
    %p63 = por %p61, %p62
    %s64 = ssub.s32 %s9, %s16
    %p65 = scmp.eq.s32.totalorder %s64, 0
    %s67 = sadd.s32 %s66, 1
    %s68 = scalar_select %p65, %s66, %s67
    %p71 = pneg %p65
    %p72 = scmp.eq.s32.totalorder %s9, 1
    %p73 = por %p71, %p72
    %p74 = scmp.ne.s32.totalorder %s66, %s69
    %p75 = scmp.eq.s32.totalorder %s9, 0
    %p76 = por %p74, %p75
    %p77 = scmp.ne.s32.totalorder %s66, %s69
    %p78 = scmp.eq.s32.totalorder %s14, 1
    %p79 = por %p77, %p78
    %p80 = scmp.ne.s32.totalorder %s69, %s70
    %p81 = scmp.eq.s32.totalorder %s14, 0
    %p82 = por %p80, %p81
    %p83 = scmp.ne.s32.totalorder %s69, %s70
    %p84 = scmp.eq.s32.totalorder %s15, 1
    %p85 = por %p83, %p84
    %p87 = scmp.ne.s32.totalorder %s70, %s86
    %p88 = scmp.eq.s32.totalorder %s15, 0
    %p89 = por %p87, %p88
    %s90 = ssub.s32 %s9, %s16
    %p91 = scmp.eq.s32.totalorder %s90, 0
    %s93 = sadd.s32 %s92, 1
    %s94 = scalar_select %p91, %s92, %s93
    %p97 = pneg %p91
    %p98 = scmp.eq.s32.totalorder %s9, 1
    %p99 = por %p97, %p98
    %p100 = scmp.ne.s32.totalorder %s92, %s95
    %p101 = scmp.eq.s32.totalorder %s9, 0
    %p102 = por %p100, %p101
    %p103 = scmp.ne.s32.totalorder %s92, %s95
    %p104 = scmp.eq.s32.totalorder %s14, 1
    %p105 = por %p103, %p104
    %p106 = scmp.ne.s32.totalorder %s95, %s96
    %p107 = scmp.eq.s32.totalorder %s14, 0
    %p108 = por %p106, %p107
    %p109 = scmp.ne.s32.totalorder %s95, %s96
    %p110 = scmp.eq.s32.totalorder %s15, 1
    %p111 = por %p109, %p110
    %p113 = scmp.ne.s32.totalorder %s96, %s112
    %p114 = scmp.eq.s32.totalorder %s15, 0
    %p115 = por %p113, %p114
    %p116 = scmp.le.s32.totalorder 1, %s9
    %p117 = scmp.lt.s32.totalorder %s9, 3
    %p118 = pnand %p116, %p117
    %p119 = pneg %p118
    // Predicated region
    $region9: #{tpu_custom_call.1} parent=5 // pred_check
      _
    $region10: #{tpu_custom_call.1} parent=5 // pred_check_branch
      %121 = sbr.rel (%p118) target = $region12
    $region11: #{tpu_custom_call.1} parent=5 // pred_region
      %s122 = ssub.s32 %s9, 1
      // Predicated region
      $region13: #{tpu_custom_call.1} parent=11 // pred_check
        %p123 = pneg %p56
      $region14: #{tpu_custom_call.1} parent=11 // pred_check_branch
        %125 = sbr.rel (%p123) target = $region16
      $region15: #{tpu_custom_call.1} parent=11 // pred_region
        _
      $region16: #{tpu_custom_call.1} parent=11 // pred_fallthru
        _
    $region12: #{tpu_custom_call.1} parent=5 // pred_fallthru
      _
    %p126 = scmp.lt.s32.totalorder %s9, 2
    // Predicated region
    $region17: #{tpu_custom_call.1} parent=5 // pred_check
      %p127 = pneg %p126
    $region18: #{tpu_custom_call.1} parent=5 // pred_check_branch
      %129 = sbr.rel (%p127) target = $region20
    $region19: #{tpu_custom_call.1} parent=5 // pred_region
      // Predicated region
      $region21: #{tpu_custom_call.1} parent=19 // pred_check
        %p130 = pneg %p29
      $region22: #{tpu_custom_call.1} parent=19 // pred_check_branch
        %132 = sbr.rel (%p130) target = $region24
      $region23: #{tpu_custom_call.1} parent=19 // pred_region
        %s133 = smul.u32 16, %s9
        %p134 = scmp.lt.s32.totalorder %s133, 31
        %s135 = scalar_select %p134, %s133, 31
        %s136 = smul.addr %s135, 8
        %s137 = scalar_lea.vmem %s0, %s136
        %s138 = smul.u32 16, %s9
      $region24: #{tpu_custom_call.1} parent=19 // pred_fallthru
        _
      // Predicated region
      $region25: #{tpu_custom_call.1} parent=19 // pred_check
        %p139 = pneg %p76
      $region26: #{tpu_custom_call.1} parent=19 // pred_check_branch
        %141 = sbr.rel (%p139) target = $region28
      $region27: #{tpu_custom_call.1} parent=19 // pred_region
        %s142 = smul.u32 16, %s9
        %p143 = scmp.lt.s32.totalorder %s142, 31
        %s144 = scalar_select %p143, %s142, 31
        %s145 = smul.addr %s144, 8
        %s146 = scalar_lea.vmem %s2, %s145
        %s147 = smul.u32 16, %s9
      $region28: #{tpu_custom_call.1} parent=19 // pred_fallthru
        _
    $region20: #{tpu_custom_call.1} parent=5 // pred_fallthru
      _
    %p148 = scmp.le.s32.totalorder 1, %s9
    %p149 = scmp.lt.s32.totalorder %s9, 3
    %p150 = pnand %p148, %p149
    %p151 = pneg %p150
    // Predicated region
    $region29: #{tpu_custom_call.1} parent=5 // pred_check
      _
    $region30: #{tpu_custom_call.1} parent=5 // pred_check_branch
      %153 = sbr.rel (%p150) target = $region32
    $region31: #{tpu_custom_call.1} parent=5 // pred_region
      %s154 = ssub.s32 %s9, 1
      %s155 = smul.u32 16, %s14
      %p156 = scmp.lt.s32.totalorder %s155, 31
      %s157 = scalar_select %p156, %s155, 31
      %s158 = smul.addr %s157, 8
      %s159 = scalar_lea.vmem %s0, %s158
      %p160 = pneg %p35
      %p161 = pneg %p32
      %p162 = pneg %p56
      %p163 = pneg %p53
      %s164 = smul.u32 16, %s14
      %p165 = scmp.lt.s32.totalorder %s164, 31
      %s166 = scalar_select %p165, %s164, 31
      %s167 = smul.addr %s166, 8
      %s168 = scalar_lea.vmem %s2, %s167
      %p169 = pneg %p82
      %p170 = pneg %p79
      %p171 = pneg %p108
      %p172 = pneg %p105
      %s173 = smul.u32 16, %s14
      %p174 = scmp.lt.s32.totalorder %s173, 31
      %s175 = scalar_select %p174, %s173, 31
      %s176 = smul.addr %s175, 8
      %s177 = scalar_lea.vmem %s3, %s176
      %s178 = smul.u32 16, %s14
      %p179 = scmp.lt.s32.totalorder %s178, 31
      %s180 = scalar_select %p179, %s178, 31
      %s181 = smul.addr %s180, 8
      %s182 = scalar_lea.vmem %s0, %s181
      %s183 = smul.u32 16, %s14
      %s184 = smul.u32 16, %s14
      %p185 = scmp.lt.s32.totalorder %s184, 31
      %s186 = scalar_select %p185, %s184, 31
      %s187 = smul.addr %s186, 8
      %s188 = scalar_lea.vmem %s2, %s187
      %s189 = smul.u32 16, %s14
      %s190 = smul.u32 16, %s14
      %p191 = scmp.lt.s32.totalorder %s190, 31
      %s192 = scalar_select %p191, %s190, 31
      %s193 = smul.addr %s192, 8
      %s194 = scalar_lea.vmem %s3, %s193
      %s195 = smul.u32 16, %s14
      %v196 = vld [vmem:[%s1] sm:$0xf]
      %v197 = vld [vmem:[%s188] sm:$0xff]
      %v198 = vld [vmem:[%s188 + $0x8] sm:$0xff]
      %v199 = vld [vmem:[%s188 + $0x10] sm:$0xff]
      %v200 = vld [vmem:[%s188 + $0x18] sm:$0xff]
      %v201 = vld [vmem:[%s188 + $0x20] sm:$0xff]
      %v202 = vld [vmem:[%s188 + $0x28] sm:$0xff]
      %v203 = vld [vmem:[%s188 + $0x30] sm:$0xff]
      %v204 = vld [vmem:[%s188 + $0x38] sm:$0xff]
      %v205 = vld [vmem:[%s188 + $0x40] sm:$0xff]
      %v206 = vld [vmem:[%s188 + $0x48] sm:$0xff]
      %v207 = vld [vmem:[%s188 + $0x50] sm:$0xff]
      %v208 = vld [vmem:[%s188 + $0x58] sm:$0xff]
      %v209 = vld [vmem:[%s188 + $0x60] sm:$0xff]
      %v210 = vld [vmem:[%s188 + $0x68] sm:$0xff]
      %v211 = vld [vmem:[%s188 + $0x70] sm:$0xff]
      %v212 = vld [vmem:[%s188 + $0x78] sm:$0xff]
      %v213 = vld [vmem:[%s182] sm:$0xff]
      %v214 = vld [vmem:[%s182 + $0x8] sm:$0xff]
      %v215 = vld [vmem:[%s182 + $0x10] sm:$0xff]
      %v216 = vld [vmem:[%s182 + $0x18] sm:$0xff]
      %v217 = vld [vmem:[%s182 + $0x20] sm:$0xff]
      %v218 = vld [vmem:[%s182 + $0x28] sm:$0xff]
      %v219 = vld [vmem:[%s182 + $0x30] sm:$0xff]
      %v220 = vld [vmem:[%s182 + $0x38] sm:$0xff]
      %v221 = vld [vmem:[%s182 + $0x40] sm:$0xff]
      %v222 = vld [vmem:[%s182 + $0x48] sm:$0xff]
      %v223 = vld [vmem:[%s182 + $0x50] sm:$0xff]
      %v224 = vld [vmem:[%s182 + $0x58] sm:$0xff]
      %v225 = vld [vmem:[%s182 + $0x60] sm:$0xff]
      %v226 = vld [vmem:[%s182 + $0x68] sm:$0xff]
      %v227 = vld [vmem:[%s182 + $0x70] sm:$0xff]
      %v228 = vld [vmem:[%s182 + $0x78] sm:$0xff]
      %v229 = vmul.f32 %v196, %v196
      %vm230 = vcmask 257024
      %v231 = vsel %vm230, %v229, 0.0
      %232 = vadd.xlane.f32.xlu0 %v231
      %v233 = vpop.xlane.xlu0 %232
      %v234 = vmax.f32 %v233, 1e-24
      %v235 = vrsqrt.pop %v234
      %v236 = vmul.f32 %v196, %v235
      %v237 = vlaneseq
      %v238 = vand.u32 %v237, 127
      %239 = vset.pattern.permute.xlu0 0
      %240 = vperm.xlu0 %239, %v213
      %v241 = vpop.permute.xlu0 %240
      %242 = vset.pattern.permute.xlu0 0
      %243 = vperm.xlu0 %242, %v214
      %v244 = vpop.permute.xlu0 %243
      %245 = vset.pattern.permute.xlu0 0
      %246 = vperm.xlu0 %245, %v215
      %v247 = vpop.permute.xlu0 %246
      %248 = vset.pattern.permute.xlu0 0
      %249 = vperm.xlu0 %248, %v216
      %v250 = vpop.permute.xlu0 %249
      %251 = vset.pattern.permute.xlu0 0
      %252 = vperm.xlu0 %251, %v217
      %v253 = vpop.permute.xlu0 %252
      %254 = vset.pattern.permute.xlu0 0
      %255 = vperm.xlu0 %254, %v218
      %v256 = vpop.permute.xlu0 %255
      %257 = vset.pattern.permute.xlu0 0
      %258 = vperm.xlu0 %257, %v219
      %v259 = vpop.permute.xlu0 %258
      %260 = vset.pattern.permute.xlu0 0
      %261 = vperm.xlu0 %260, %v220
      %v262 = vpop.permute.xlu0 %261
      %263 = vset.pattern.permute.xlu0 0
      %264 = vperm.xlu0 %263, %v221
      %v265 = vpop.permute.xlu0 %264
      %266 = vset.pattern.permute.xlu0 0
      %267 = vperm.xlu0 %266, %v222
      %v268 = vpop.permute.xlu0 %267
      %269 = vset.pattern.permute.xlu0 0
      %270 = vperm.xlu0 %269, %v223
      %v271 = vpop.permute.xlu0 %270
      %272 = vset.pattern.permute.xlu0 0
      %273 = vperm.xlu0 %272, %v224
      %v274 = vpop.permute.xlu0 %273
      %275 = vset.pattern.permute.xlu0 0
      %276 = vperm.xlu0 %275, %v225
      %v277 = vpop.permute.xlu0 %276
      %278 = vset.pattern.permute.xlu0 0
      %279 = vperm.xlu0 %278, %v226
      %v280 = vpop.permute.xlu0 %279
      %281 = vset.pattern.permute.xlu0 0
      %282 = vperm.xlu0 %281, %v227
      %v283 = vpop.permute.xlu0 %282
      %284 = vset.pattern.permute.xlu0 0
      %285 = vperm.xlu0 %284, %v228
      %v286 = vpop.permute.xlu0 %285
      %vm287 = vcmp.eq.s32.totalorder %v241, %v238
      %vm288 = vcmp.eq.s32.totalorder %v244, %v238
      %vm289 = vcmp.eq.s32.totalorder %v247, %v238
      %vm290 = vcmp.eq.s32.totalorder %v250, %v238
      %vm291 = vcmp.eq.s32.totalorder %v253, %v238
      %vm292 = vcmp.eq.s32.totalorder %v256, %v238
      %vm293 = vcmp.eq.s32.totalorder %v259, %v238
      %vm294 = vcmp.eq.s32.totalorder %v262, %v238
      %vm295 = vcmp.eq.s32.totalorder %v265, %v238
      %vm296 = vcmp.eq.s32.totalorder %v268, %v238
      %vm297 = vcmp.eq.s32.totalorder %v271, %v238
      %vm298 = vcmp.eq.s32.totalorder %v274, %v238
      %vm299 = vcmp.eq.s32.totalorder %v277, %v238
      %vm300 = vcmp.eq.s32.totalorder %v280, %v238
      %vm301 = vcmp.eq.s32.totalorder %v283, %v238
      %vm302 = vcmp.eq.s32.totalorder %v286, %v238
      %v303 = vsel %vm287, 1, 0
      %v304 = vsel %vm288, 1, 0
      %v305 = vsel %vm289, 1, 0
      %v306 = vsel %vm290, 1, 0
      %v307 = vsel %vm291, 1, 0
      %v308 = vsel %vm292, 1, 0
      %v309 = vsel %vm293, 1, 0
      %v310 = vsel %vm294, 1, 0
      %v311 = vsel %vm295, 1, 0
      %v312 = vsel %vm296, 1, 0
      %v313 = vsel %vm297, 1, 0
      %v314 = vsel %vm298, 1, 0
      %v315 = vsel %vm299, 1, 0
      %v316 = vsel %vm300, 1, 0
      %v317 = vsel %vm301, 1, 0
      %v318 = vsel %vm302, 1, 0
      %v319 = vcvt.s32.f32 %v303
      %v320 = vcvt.s32.f32 %v304
      %v321 = vcvt.s32.f32 %v305
      %v322 = vcvt.s32.f32 %v306
      %v323 = vcvt.s32.f32 %v307
      %v324 = vcvt.s32.f32 %v308
      %v325 = vcvt.s32.f32 %v309
      %v326 = vcvt.s32.f32 %v310
      %v327 = vcvt.s32.f32 %v311
      %v328 = vcvt.s32.f32 %v312
      %v329 = vcvt.s32.f32 %v313
      %v330 = vcvt.s32.f32 %v314
      %v331 = vcvt.s32.f32 %v315
      %v332 = vcvt.s32.f32 %v316
      %v333 = vcvt.s32.f32 %v317
      %v334 = vcvt.s32.f32 %v318
      %vm335 = vcmask 31744
      %v337 = vsel %vm335, %v319, 0
      %v340 = vsel %vm335, %v320, 0
      %v343 = vsel %vm335, %v321, 0
      %v346 = vsel %vm335, %v322, 0
      %v349 = vsel %vm335, %v323, 0
      %v352 = vsel %vm335, %v324, 0
      %v355 = vsel %vm335, %v325, 0
      %v358 = vsel %vm335, %v326, 0
      %v361 = vsel %vm335, %v327, 0
      %v364 = vsel %vm335, %v328, 0
      %v367 = vsel %vm335, %v329, 0
      %v370 = vsel %vm335, %v330, 0
      %v373 = vsel %vm335, %v331, 0
      %v376 = vsel %vm335, %v332, 0
      %v379 = vsel %vm335, %v333, 0
      %v382 = vsel %vm335, %v334, 0
      %vm384 = vcmask 1043456
      %v386 = vsel %vm384, %v236, 0
      %388 = vmatprep.subr.mxu0 0.0
      %389 = vmatpush1.msra.mxu0 %v386
      %390 = vmatprep.subr.mxu0 0.0
      %391 = vmatpush1.msra.mxu0 0.0
      %392 = vmatprep.subr.mxu0 0.0
      %393 = vmatpush1.msra.mxu0 0.0
      %394 = vmatprep.subr.mxu0 0.0
      %395 = vmatpush1.msra.mxu0 0.0
      %396 = vmatprep.subr.mxu0 0.0
      %397 = vmatpush1.msra.mxu0 0.0
      %398 = vmatprep.subr.mxu0 0.0
      %399 = vmatpush1.msra.mxu0 0.0
      %400 = vmatprep.subr.mxu0 0.0
      %401 = vmatpush1.msra.mxu0 0.0
      %402 = vmatprep.subr.mxu0 0.0
      %403 = vmatpush1.msra.mxu0 0.0
      %404 = vmatprep.subr.mxu0 0.0
      %405 = vmatpush1.msra.mxu0 0.0
      %406 = vmatprep.subr.mxu0 0.0
      %407 = vmatpush1.msra.mxu0 0.0
      %408 = vmatprep.subr.mxu0 0.0
      %409 = vmatpush1.msra.mxu0 0.0
      %410 = vmatprep.subr.mxu0 0.0
      %411 = vmatpush1.msra.mxu0 0.0
      %412 = vmatprep.subr.mxu0 0.0
      %413 = vmatpush1.msra.mxu0 0.0
      %414 = vmatprep.subr.mxu0 0.0
      %415 = vmatpush1.msra.mxu0 0.0
      %416 = vmatprep.subr.mxu0 0.0
      %417 = vmatpush1.msra.mxu0 0.0
      %418 = vmatprep.subr.mxu0 0.0
      %419 = vmatpush1.msra.mxu0 0.0
      %420 = vmatprep.subr.mxu0 0.0
      %421 = vmatpush1.msra.mxu0 0.0
      %422 = vmatprep.subr.mxu0 0.0
      %423 = vmatpush1.msra.mxu0 0.0
      %424 = vmatprep.subr.mxu0 0.0
      %425 = vmatpush1.msra.mxu0 0.0
      %426 = vmatprep.subr.mxu0 0.0
      %427 = vmatpush1.msra.mxu0 0.0
      %428 = vmatprep.subr.mxu0 0.0
      %429 = vmatpush1.msra.mxu0 0.0
      %430 = vmatprep.subr.mxu0 0.0
      %431 = vmatpush1.msra.mxu0 0.0
      %432 = vmatprep.subr.mxu0 0.0
      %433 = vmatpush1.msra.mxu0 0.0
      %434 = vmatprep.subr.mxu0 0.0
      %435 = vmatpush1.msra.mxu0 0.0
      %436 = vmatprep.subr.mxu0 0.0
      %437 = vmatpush1.msra.mxu0 0.0
      %438 = vmatprep.subr.mxu0 0.0
      %439 = vmatpush1.msra.mxu0 0.0
      %440 = vmatprep.subr.mxu0 0.0
      %441 = vmatpush1.msra.mxu0 0.0
      %442 = vmatprep.subr.mxu0 0.0
      %443 = vmatpush1.msra.mxu0 0.0
      %444 = vmatprep.subr.mxu0 0.0
      %445 = vmatpush1.msra.mxu0 0.0
      %446 = vmatprep.subr.mxu0 0.0
      %447 = vmatpush1.msra.mxu0 0.0
      %448 = vmatprep.subr.mxu0 0.0
      %449 = vmatpush1.msra.mxu0 0.0
      %450 = vmatprep.subr.mxu0 0.0
      %451 = vmatpush1.msra.mxu0 0.0
      %452 = vmatprep.mubr.f32.mxu0 0.0
      %453 = vmatmul.mubr.f32.gmra.mrb[0].mxu0 %v337
      %v454 = vpop.f32.mrb[0].mxu0
      %v455 = vadd.f32 0.0, %v454
      %v456 = vpop.f32.mrb[0].mxu0
      %457 = vmatprep.mubr.f32.mxu0 0.0
      %458 = vmatmul.mubr.f32.gmra.mrb[0].mxu0 %v340
      %v459 = vpop.f32.mrb[0].mxu0
      %v460 = vadd.f32 0.0, %v459
      %v461 = vpop.f32.mrb[0].mxu0
      %462 = vmatprep.mubr.f32.mxu0 0.0
      %463 = vmatmul.mubr.f32.gmra.mrb[0].mxu0 %v343
      %v464 = vpop.f32.mrb[0].mxu0
      %v465 = vadd.f32 0.0, %v464
      %v466 = vpop.f32.mrb[0].mxu0
      %467 = vmatprep.mubr.f32.mxu0 0.0
      %468 = vmatmul.mubr.f32.gmra.mrb[0].mxu0 %v346
      %v469 = vpop.f32.mrb[0].mxu0
      %v470 = vadd.f32 0.0, %v469
      %v471 = vpop.f32.mrb[0].mxu0
      %472 = vmatprep.mubr.f32.mxu0 0.0
      %473 = vmatmul.mubr.f32.gmra.mrb[0].mxu0 %v349
      %v474 = vpop.f32.mrb[0].mxu0
      %v475 = vadd.f32 0.0, %v474
      %v476 = vpop.f32.mrb[0].mxu0
      %477 = vmatprep.mubr.f32.mxu0 0.0
      %478 = vmatmul.mubr.f32.gmra.mrb[0].mxu0 %v352
      %v479 = vpop.f32.mrb[0].mxu0
      %v480 = vadd.f32 0.0, %v479
      %v481 = vpop.f32.mrb[0].mxu0
      %482 = vmatprep.mubr.f32.mxu0 0.0
      %483 = vmatmul.mubr.f32.gmra.mrb[0].mxu0 %v355
      %v484 = vpop.f32.mrb[0].mxu0
      %v485 = vadd.f32 0.0, %v484
      %v486 = vpop.f32.mrb[0].mxu0
      %487 = vmatprep.mubr.f32.mxu0 0.0
      %488 = vmatmul.mubr.f32.gmra.mrb[0].mxu0 %v358
      %v489 = vpop.f32.mrb[0].mxu0
      %v490 = vadd.f32 0.0, %v489
      %v491 = vpop.f32.mrb[0].mxu0
      %492 = vmatprep.mubr.f32.mxu0 0.0
      %493 = vmatmul.mubr.f32.gmra.mrb[0].mxu0 %v361
      %v494 = vpop.f32.mrb[0].mxu0
      %v495 = vadd.f32 0.0, %v494
      %v496 = vpop.f32.mrb[0].mxu0
      %497 = vmatprep.mubr.f32.mxu0 0.0
      %498 = vmatmul.mubr.f32.gmra.mrb[0].mxu0 %v364
      %v499 = vpop.f32.mrb[0].mxu0
      %v500 = vadd.f32 0.0, %v499
      %v501 = vpop.f32.mrb[0].mxu0
      %502 = vmatprep.mubr.f32.mxu0 0.0
      %503 = vmatmul.mubr.f32.gmra.mrb[0].mxu0 %v367
      %v504 = vpop.f32.mrb[0].mxu0
      %v505 = vadd.f32 0.0, %v504
      %v506 = vpop.f32.mrb[0].mxu0
      %507 = vmatprep.mubr.f32.mxu0 0.0
      %508 = vmatmul.mubr.f32.gmra.mrb[0].mxu0 %v370
      %v509 = vpop.f32.mrb[0].mxu0
      %v510 = vadd.f32 0.0, %v509
      %v511 = vpop.f32.mrb[0].mxu0
      %512 = vmatprep.mubr.f32.mxu0 0.0
      %513 = vmatmul.mubr.f32.gmra.mrb[0].mxu0 %v373
      %v514 = vpop.f32.mrb[0].mxu0
      %v515 = vadd.f32 0.0, %v514
      %v516 = vpop.f32.mrb[0].mxu0
      %517 = vmatprep.mubr.f32.mxu0 0.0
      %518 = vmatmul.mubr.f32.gmra.mrb[0].mxu0 %v376
      %v519 = vpop.f32.mrb[0].mxu0
      %v520 = vadd.f32 0.0, %v519
      %v521 = vpop.f32.mrb[0].mxu0
      %522 = vmatprep.mubr.f32.mxu0 0.0
      %523 = vmatmul.mubr.f32.gmra.mrb[0].mxu0 %v379
      %v524 = vpop.f32.mrb[0].mxu0
      %v525 = vadd.f32 0.0, %v524
      %v526 = vpop.f32.mrb[0].mxu0
      %527 = vmatprep.mubr.f32.mxu0 0.0
      %528 = vmatmul.mubr.f32.gmra.mrb[0].mxu0 %v382
      %v529 = vpop.f32.mrb[0].mxu0
      %v530 = vadd.f32 0.0, %v529
      %v531 = vpop.f32.mrb[0].mxu0
      %532 = vdwg.mxu0
      %v533 = vmul.f32 %v455, %v197
      %v534 = vmul.f32 %v460, %v198
      %v535 = vmul.f32 %v465, %v199
      %v536 = vmul.f32 %v470, %v200
      %v537 = vmul.f32 %v475, %v201
      %v538 = vmul.f32 %v480, %v202
      %v539 = vmul.f32 %v485, %v203
      %v540 = vmul.f32 %v490, %v204
      %v541 = vmul.f32 %v495, %v205
      %v542 = vmul.f32 %v500, %v206
      %v543 = vmul.f32 %v505, %v207
      %v544 = vmul.f32 %v510, %v208
      %v545 = vmul.f32 %v515, %v209
      %v546 = vmul.f32 %v520, %v210
      %v547 = vmul.f32 %v525, %v211
      %v548 = vmul.f32 %v530, %v212
      %vm549 = vcmask 261120
      %v550 = vsel %vm549, %v533, 0.0
      %551 = vadd.xlane.f32.xlu0 %v550
      %v552 = vpop.xlane.xlu0 %551
      %v553 = vsel %vm549, %v534, 0.0
      %554 = vadd.xlane.f32.xlu0 %v553
      %v555 = vpop.xlane.xlu0 %554
      %v556 = vsel %vm549, %v535, 0.0
      %557 = vadd.xlane.f32.xlu0 %v556
      %v558 = vpop.xlane.xlu0 %557
      %v559 = vsel %vm549, %v536, 0.0
      %560 = vadd.xlane.f32.xlu0 %v559
      %v561 = vpop.xlane.xlu0 %560
      %v562 = vsel %vm549, %v537, 0.0
      %563 = vadd.xlane.f32.xlu0 %v562
      %v564 = vpop.xlane.xlu0 %563
      %v565 = vsel %vm549, %v538, 0.0
      %566 = vadd.xlane.f32.xlu0 %v565
      %v567 = vpop.xlane.xlu0 %566
      %v568 = vsel %vm549, %v539, 0.0
      %569 = vadd.xlane.f32.xlu0 %v568
      %v570 = vpop.xlane.xlu0 %569
      %v571 = vsel %vm549, %v540, 0.0
      %572 = vadd.xlane.f32.xlu0 %v571
      %v573 = vpop.xlane.xlu0 %572
      %v574 = vsel %vm549, %v541, 0.0
      %575 = vadd.xlane.f32.xlu0 %v574
      %v576 = vpop.xlane.xlu0 %575
      %v577 = vsel %vm549, %v542, 0.0
      %578 = vadd.xlane.f32.xlu0 %v577
      %v579 = vpop.xlane.xlu0 %578
      %v580 = vsel %vm549, %v543, 0.0
      %581 = vadd.xlane.f32.xlu0 %v580
      %v582 = vpop.xlane.xlu0 %581
      %v583 = vsel %vm549, %v544, 0.0
      %584 = vadd.xlane.f32.xlu0 %v583
      %v585 = vpop.xlane.xlu0 %584
      %v586 = vsel %vm549, %v545, 0.0
      %587 = vadd.xlane.f32.xlu0 %v586
      %v588 = vpop.xlane.xlu0 %587
      %v589 = vsel %vm549, %v546, 0.0
      %590 = vadd.xlane.f32.xlu0 %v589
      %v591 = vpop.xlane.xlu0 %590
      %v592 = vsel %vm549, %v547, 0.0
      %593 = vadd.xlane.f32.xlu0 %v592
      %v594 = vpop.xlane.xlu0 %593
      %v595 = vsel %vm549, %v548, 0.0
      %596 = vadd.xlane.f32.xlu0 %v595
      %v597 = vpop.xlane.xlu0 %596
      %v598 = vmul.f32 %v552, %v455
      %v599 = vmul.f32 %v555, %v460
      %v600 = vmul.f32 %v558, %v465
      %v601 = vmul.f32 %v561, %v470
      %v602 = vmul.f32 %v564, %v475
      %v603 = vmul.f32 %v567, %v480
      %v604 = vmul.f32 %v570, %v485
      %v605 = vmul.f32 %v573, %v490
      %v606 = vmul.f32 %v576, %v495
      %v607 = vmul.f32 %v579, %v500
      %v608 = vmul.f32 %v582, %v505
      %v609 = vmul.f32 %v585, %v510
      %v610 = vmul.f32 %v588, %v515
      %v611 = vmul.f32 %v591, %v520
      %v612 = vmul.f32 %v594, %v525
      %v613 = vmul.f32 %v597, %v530
      %v614 = vsub.f32 %v197, %v598
      %v615 = vsub.f32 %v198, %v599
      %v616 = vsub.f32 %v199, %v600
      %v617 = vsub.f32 %v200, %v601
      %v618 = vsub.f32 %v201, %v602
      %v619 = vsub.f32 %v202, %v603
      %v620 = vsub.f32 %v203, %v604
      %v621 = vsub.f32 %v204, %v605
      %v622 = vsub.f32 %v205, %v606
      %v623 = vsub.f32 %v206, %v607
      %v624 = vsub.f32 %v207, %v608
      %v625 = vsub.f32 %v208, %v609
      %v626 = vsub.f32 %v209, %v610
      %v627 = vsub.f32 %v210, %v611
      %v628 = vsub.f32 %v211, %v612
      %v629 = vsub.f32 %v212, %v613
      %630 = vst.msk [vmem:[%s194] sm:$0xff] %vm549, %v614
      %631 = vst.msk [vmem:[%s194 + $0x8] sm:$0xff] %vm549, %v615
      %632 = vst.msk [vmem:[%s194 + $0x10] sm:$0xff] %vm549, %v616
      %633 = vst.msk [vmem:[%s194 + $0x18] sm:$0xff] %vm549, %v617
      %634 = vst.msk [vmem:[%s194 + $0x20] sm:$0xff] %vm549, %v618
      %635 = vst.msk [vmem:[%s194 + $0x28] sm:$0xff] %vm549, %v619
      %636 = vst.msk [vmem:[%s194 + $0x30] sm:$0xff] %vm549, %v620
      %637 = vst.msk [vmem:[%s194 + $0x38] sm:$0xff] %vm549, %v621
      %638 = vst.msk [vmem:[%s194 + $0x40] sm:$0xff] %vm549, %v622
      %639 = vst.msk [vmem:[%s194 + $0x48] sm:$0xff] %vm549, %v623
      %640 = vst.msk [vmem:[%s194 + $0x50] sm:$0xff] %vm549, %v624
      %641 = vst.msk [vmem:[%s194 + $0x58] sm:$0xff] %vm549, %v625
      %642 = vst.msk [vmem:[%s194 + $0x60] sm:$0xff] %vm549, %v626
      %643 = vst.msk [vmem:[%s194 + $0x68] sm:$0xff] %vm549, %v627
      %644 = vst.msk [vmem:[%s194 + $0x70] sm:$0xff] %vm549, %v628
      %645 = vst.msk [vmem:[%s194 + $0x78] sm:$0xff] %vm549, %v629
      %s646 = smul.u32 16, %s14
      %p647 = scmp.lt.s32.totalorder %s646, 31
      %s648 = scalar_select %p647, %s646, 31
      %s649 = smul.addr %s648, 8
      %s650 = scalar_lea.vmem %s3, %s649
      // Predicated region
      $region33: #{tpu_custom_call.1} parent=31 // pred_check
        %p651 = pneg %p105
      $region34: #{tpu_custom_call.1} parent=31 // pred_check_branch
        %653 = sbr.rel (%p651) target = $region36
      $region35: #{tpu_custom_call.1} parent=31 // pred_region
        %s654 = smul.u32 16, %s14
      $region36: #{tpu_custom_call.1} parent=31 // pred_fallthru
        _
    $region32: #{tpu_custom_call.1} parent=5 // pred_fallthru
      _
    %p655 = scmp.le.s32.totalorder 2, %s9
    // Predicated region
    $region37: #{tpu_custom_call.1} parent=5 // pred_check
      %p656 = pneg %p655
    $region38: #{tpu_custom_call.1} parent=5 // pred_check_branch
      %658 = sbr.rel (%p656) target = $region40
    $region39: #{tpu_custom_call.1} parent=5 // pred_region
      %s659 = ssub.s32 %s9, 2
      // Predicated region
      $region41: #{tpu_custom_call.1} parent=39 // pred_check
        %p660 = pneg %p111
      $region42: #{tpu_custom_call.1} parent=39 // pred_check_branch
        %662 = sbr.rel (%p660) target = $region44
      $region43: #{tpu_custom_call.1} parent=39 // pred_region
        %s663 = smul.u32 16, %s15
        %p664 = scmp.lt.s32.totalorder %s663, 31
        %s665 = scalar_select %p664, %s663, 31
        %s666 = smul.addr %s665, 8
        %s667 = scalar_lea.vmem %s3, %s666
      $region44: #{tpu_custom_call.1} parent=39 // pred_fallthru
        _
    $region40: #{tpu_custom_call.1} parent=5 // pred_fallthru
      _
  $region6: #{tpu_custom_call.1} parent=0 // loop_footer
    %s13 = sadd.s32 1, %s9
  $region7: #{tpu_custom_call.1} parent=0 // loop_footer_branch
    %8 = sbr.rel target = $region3
  $region8: #{tpu_custom_call.1} parent=0 // loop_exit
    _

</llo_original>
